<compile_context>
chip_gen: v5e
topology: v5e:2x2
jax: 0.10.0
libtpu: 0.0.40
codegen_flags: <defaults>
</compile_context>

<pallas_src>
import functools

import jax
import jax.numpy as jnp
from jax.experimental import pallas as pl
from jax.experimental.pallas import tpu as pltpu


def _round_up(x, m):
    return ((x + m - 1) // m) * m


def _vmem_limit_bytes():
    """Per-chip scoped-VMEM limit: ~100 MiB on 128-MiB parts (v5e/v6e),
    ~48 MiB on the 64-MiB v7x; conservative fallback if the query fails."""
    phys = 64 * 1024 * 1024
    try:
        phys = int(pltpu.get_tpu_info().vmem_capacity_bytes)
    except Exception:
        pass
    return int(min(max(phys - 16 * 1024 * 1024, 32 * 1024 * 1024),
                   100 * 1024 * 1024))


def _pick_batch_tile(B, S, E, npad, out_pad, fc_in, vmem_limit, max_tb=512):
    """Largest batch tile (multiple of 8) whose VMEM footprint -- gathered f32
    rows, the f32 (tb,S,NPAD) matmul intermediate + scratch, and the
    double-buffered output block -- fits inside ~70% of the scoped limit after
    subtracting the (double-buffered) resident weights."""
    e_lanes = _round_up(E, 128)
    fixed = 2 * (_round_up(E, 16) * npad * 2            # wbig  bf16
                 + 8 * npad * 4                         # bbig  f32
                 + _round_up(fc_in, 16) * out_pad * 2   # wfc   bf16
                 + 8 * out_pad * 4)                     # bfc   f32
    per_row = (S * e_lanes * 4        # emb_buf (gathered f32 rows)
               + S * e_lanes * 2      # bf16 cast of the matmul LHS
               + 2 * S * npad * 4     # y scratch + matmul result staging
               + 2 * out_pad * 4)     # double-buffered output block
    budget = int(vmem_limit * 0.7) - fixed
    tb = budget // max(per_row, 1)
    tb = min(tb, max_tb, _round_up(B, 8))
    return max(8, (tb // 8) * 8)


def _textcnn_kernel(tokens_ref, emb_hbm, wbig_ref, bbig_ref, wfc_ref, bfc_ref,
                    out_ref, emb_buf, y_ref, sem, *,
                    kernel_heights, out_channels, c_blk):
    """One batch tile of the TextCNN forward, embedding gather included.

    tokens_ref: (BP*S,)        int32 SMEM (scalar prefetch) flattened token ids
    emb_hbm   : (V, E)         f32   HBM embedding table (raw ref, manual DMA)
    wbig_ref  : (E, NPAD)      bf16  fused conv weights (branch-major taps)
    bbig_ref  : (1, NPAD)      f32   conv biases in each branch's dh=0 block
    wfc_ref   : (3C, OUT_PAD)  bf16  FC weight (lane padded)
    bfc_ref   : (1, OUT_PAD)   f32   FC bias   (lane padded)
    out_ref   : (TB, OUT_PAD)  f32   logits (padded; wrapper slices them)
    emb_buf   : (TB*S, E)      f32   VMEM scratch, gathered embedding rows
    y_ref     : (TB, S, NPAD)  f32   VMEM scratch, fused matmul output
    sem       : DMA sem (1,)
    """
    C = out_channels
    TB, S, NPAD = y_ref.shape
    rows = TB * S
    base = pl.program_id(0) * rows

    # ---- Fused embedding gather: one f32 row DMA per token (HBM -> VMEM) --
    # TODO(synk): chunk the issue/wait loops and overlap them with per-chunk
    # matmuls for very large tiles (kept flat here: no cross-grid-step state,
    # so the batch axis stays megacore-safe under "parallel").
    @pl.loop(0, rows)
    def _issue(i):
        tok = tokens_ref[base + i]
        pltpu.make_async_copy(emb_hbm.at[tok], emb_buf.at[i], sem.at[0]).start()

    @pl.loop(0, rows)
    def _drain(i):
        # Same-shaped descriptor: one wait per started row copy.
        pltpu.make_async_copy(emb_hbm.at[0], emb_buf.at[0], sem.at[0]).wait()

    # ---- One lane-dense MXU matmul replaces all 3+4+5 sliver conv matmuls --
    x = emb_buf[...].astype(jnp.bfloat16)                      # (TB*S, E)
    y = jnp.dot(x, wbig_ref[...], preferred_element_type=jnp.float32)
    # Conv biases are folded into each branch's dh=0 column block, so the
    # broadcast is emitted once; park y in VMEM scratch to cap vreg pressure.
    y_ref[...] = (y + bbig_ref[...]).reshape(TB, S, NPAD)

    # ---- Per-branch shifted add + ReLU + max-over-time (VPU/XLU) ----------
    feats = []
    off = 0
    for kh in kernel_heights:
        L = S - kh + 1
        acc = y_ref[:, 0:L, off:off + C]
        for dh in range(1, kh):
            col = off + dh * c_blk
            acc = acc + y_ref[:, dh:dh + L, col:col + C]
        feats.append(jnp.max(jnp.maximum(acc, 0.0), axis=1))   # (TB, C)
        off += kh * c_blk

    feat = jnp.concatenate(feats, axis=1)                      # (TB, 3C) f32
    # nn.Dropout is the identity in eval mode.
    logits = jnp.dot(feat.astype(wfc_ref.dtype), wfc_ref[...],
                     preferred_element_type=jnp.float32)       # (TB, OUT_PAD)
    out_ref[...] = logits + bfc_ref[...]


def pack_params(params, *, kernel_heights, out_channels, output_size):
    """Fuse the three conv weights/biases into one lane-dense (E, NPAD) matmul
    operand and pad the FC weight/bias to a 128-lane output."""
    C = out_channels
    E = params["w1"].shape[1]
    # Lane-align each per-tap column block only when C is large enough that
    # the extra MXU columns are cheap relative to the masked-slice savings
    # (skip for tiny C, e.g. the demo's C=8, where NPAD would balloon).
    c_blk = _round_up(C, 128) if C >= 64 else C
    w_cols, b_cols = [], []
    for i, kh in enumerate(kernel_heights, start=1):
        w = params[f"w{i}"]                                    # (kh, E, C)
        b = params[f"b{i}"]                                    # (1, C)
        for dh in range(kh):
            w_cols.append(jnp.pad(w[dh], ((0, 0), (0, c_blk - C))))
            bias = b.reshape(1, C) if dh == 0 else jnp.zeros((1, C), w.dtype)
            b_cols.append(jnp.pad(bias, ((0, 0), (0, c_blk - C))))
    ntot = sum(kernel_heights) * c_blk
    npad = max(128, _round_up(ntot, 128))
    wbig = jnp.pad(jnp.concatenate(w_cols, axis=1),
                   ((0, 0), (0, npad - ntot))).astype(jnp.bfloat16)
    bbig = jnp.pad(jnp.concatenate(b_cols, axis=1),
                   ((0, 0), (0, npad - ntot))).astype(jnp.float32)

    out_pad = max(128, _round_up(output_size, 128))
    wfc = jnp.pad(params["fc_w"],
                  ((0, 0), (0, out_pad - output_size))).astype(jnp.bfloat16)
    bfc = jnp.pad(params["fc_b"],
                  ((0, 0), (0, out_pad - output_size))).astype(jnp.float32)
    return wbig, bbig, wfc, bfc, npad, out_pad, c_blk


def textcnn_forward(tokens, params, *, kernel_heights, out_channels,
                    output_size, max_batch_tile=512):
    """tokens: (B, S) int32.  Returns logits (B, output_size) f32."""
    B, S = tokens.shape
    assert S >= max(kernel_heights), "sequence shorter than largest kernel"
    emb_table = params["emb_table"]                            # (V, E) f32
    E = emb_table.shape[1]
    C = out_channels
    fc_in = len(kernel_heights) * C

    wbig, bbig, wfc, bfc, npad, out_pad, c_blk = pack_params(
        params, kernel_heights=kernel_heights, out_channels=C,
        output_size=output_size)

    vmem_limit = _vmem_limit_bytes()
    tb = _pick_batch_tile(B, S, E, npad, out_pad, fc_in, vmem_limit,
                          max_tb=max_batch_tile)
    bp = _round_up(B, tb)

    # Token ids ride in SMEM via scalar prefetch (flattened 1-D to avoid the
    # [.,128]-word SMEM padding of a 2-D layout).  The embedding gather runs
    # inside the kernel straight from the f32 table in HBM, so the (B,S,E)
    # activation never makes an extra HBM round trip.
    tokens_p = tokens if bp == B else jnp.pad(tokens, ((0, bp - B), (0, 0)))
    tokens_flat = tokens_p.reshape(-1).astype(jnp.int32)

    kernel = functools.partial(_textcnn_kernel,
                               kernel_heights=tuple(kernel_heights),
                               out_channels=C, c_blk=c_blk)

    # TODO(synk): single-buffer the constant weight specs (pl.Buffered(1)) and
    # add an S-axis grid (halo = max(kh)-1, running-max scratch) for very long
    # sequences, once validated on all three chip generations.
    out = pl.pallas_call(
        kernel,
        out_shape=jax.ShapeDtypeStruct((bp, out_pad), jnp.float32),
        grid_spec=pltpu.PrefetchScalarGridSpec(
            num_scalar_prefetch=1,
            grid=(bp // tb,),
            in_specs=[
                pl.BlockSpec(memory_space=pl.ANY),             # emb table, HBM
                pl.BlockSpec((E, npad), lambda i, tok: (0, 0)),
                pl.BlockSpec((1, npad), lambda i, tok: (0, 0)),
                pl.BlockSpec((fc_in, out_pad), lambda i, tok: (0, 0)),
                pl.BlockSpec((1, out_pad), lambda i, tok: (0, 0)),
            ],
            out_specs=pl.BlockSpec((tb, out_pad), lambda i, tok: (i, 0)),
            scratch_shapes=[
                pltpu.VMEM((tb * S, E), jnp.float32),          # gathered rows
                pltpu.VMEM((tb, S, npad), jnp.float32),        # fused matmul y
                pltpu.SemaphoreType.DMA((1,)),
            ]),
        compiler_params=pltpu.CompilerParams(
            dimension_semantics=("parallel",),                 # 2 TCs on v7x
            vmem_limit_bytes=vmem_limit),
    )(tokens_flat, emb_table, wbig, bbig, wfc, bfc)
    return out[:B, :output_size]


def init_params(key, *, vocab_size, embedding_length, out_channels,
                kernel_heights, output_size):
    """Deterministic synthetic parameters matching the module's shapes."""
    ks = jax.random.split(key, 9)
    E, C = embedding_length, out_channels

    def conv_w(k, kh):
        # PyTorch Conv2d weight is (C, in=1, kh, E); stored transposed as
        # (kh, E, C) so the kernel does (L,E)@(E,C) matmuls directly.
        fan_in = kh * E
        return jax.random.uniform(k, (kh, E, C), jnp.float32,
                                  -1.0 / jnp.sqrt(fan_in),
                                  1.0 / jnp.sqrt(fan_in))

    return {
        "emb_table": jax.random.normal(ks[0], (vocab_size, E), jnp.float32),
        "w1": conv_w(ks[1], kernel_heights[0]),
        "b1": jax.random.normal(ks[2], (1, C), jnp.float32) * 0.01,
        "w2": conv_w(ks[3], kernel_heights[1]),
        "b2": jax.random.normal(ks[4], (1, C), jnp.float32) * 0.01,
        "w3": conv_w(ks[5], kernel_heights[2]),
        "b3": jax.random.normal(ks[6], (1, C), jnp.float32) * 0.01,
        # nn.Linear(3C, output_size): weight (out, 3C) -> stored as (3C, out)
        "fc_w": jax.random.normal(ks[7], (3 * C, output_size),
                                  jnp.float32) / jnp.sqrt(3 * C),
        "fc_b": jax.random.normal(ks[8], (1, output_size), jnp.float32) * 0.01,
    }


def reference_forward(tokens, params, *, kernel_heights):
    """Pure-JAX reference mirroring the PyTorch forward (eval mode), using the
    same bf16-operand / f32-accumulate precision the kernel uses on the MXU."""
    emb = params["emb_table"].astype(jnp.bfloat16)[tokens]     # (B, S, E)
    B, S, E = emb.shape
    feats = []
    for i, kh in enumerate(kernel_heights, start=1):
        w = params[f"w{i}"].astype(jnp.bfloat16)
        b = params[f"b{i}"]
        C = w.shape[-1]
        L = S - kh + 1
        acc = jnp.zeros((B, L, C), jnp.float32)
        for dh in range(kh):
            acc = acc + jax.lax.dot_general(
                emb[:, dh:dh + L, :], w[dh],
                dimension_numbers=(((2,), (0,)), ((), ())),
                preferred_element_type=jnp.float32)
        acc = acc + b.reshape(1, 1, C)
        feats.append(jnp.max(jnp.maximum(acc, 0.0), axis=1))
    feat = jnp.concatenate(feats, axis=1).astype(jnp.bfloat16)
    logits = jnp.dot(feat, params["fc_w"].astype(jnp.bfloat16),
                     preferred_element_type=jnp.float32)
    return logits + params["fc_b"]


if __name__ == "__main__":
    # Small shapes consistent with the module's forward.
    batch_size = 2
    num_seq = 16
    vocab_size = 32
    embedding_length = 32
    out_channels = 8
    kernel_heights = (3, 4, 5)
    output_size = 2

    key = jax.random.PRNGKey(0)
    pkey, tkey = jax.random.split(key)
    params = init_params(pkey,
                         vocab_size=vocab_size,
                         embedding_length=embedding_length,
                         out_channels=out_channels,
                         kernel_heights=kernel_heights,
                         output_size=output_size)
    tokens = jax.random.randint(tkey, (batch_size, num_seq), 0, vocab_size,
                                dtype=jnp.int32)

    fwd = jax.jit(functools.partial(textcnn_forward,
                                    kernel_heights=kernel_heights,
                                    out_channels=out_channels,
                                    output_size=output_size))
    logits = jax.block_until_ready(fwd(tokens, params))

    ref = jax.block_until_ready(
        reference_forward(tokens, params, kernel_heights=kernel_heights))
    assert logits.shape == (batch_size, output_size)
    assert jnp.allclose(logits, ref, atol=1e-2, rtol=1e-2), (logits, ref)

    print("KERNEL_OK")
</pallas_src>

<mosaic_0001>
module attributes {stable_mosaic.version = 11 : i64} {
  func.func @_textcnn_kernel(%arg0: i32, %arg1: memref<128xi32, #tpu.memory_space<smem>>, %arg2: memref<32x32xf32, #tpu.memory_space<any>>, %arg3: memref<32x128xbf16, #tpu.memory_space<vmem>>, %arg4: memref<1x128xf32, #tpu.memory_space<vmem>>, %arg5: memref<24x128xbf16, #tpu.memory_space<vmem>>, %arg6: memref<1x128xf32, #tpu.memory_space<vmem>>, %arg7: memref<8x128xf32, #tpu.memory_space<vmem>>, %arg8: memref<128x32xf32, #tpu.memory_space<vmem>>, %arg9: memref<8x16x128xf32, #tpu.memory_space<vmem>>, %arg10: memref<1x!tpu.dma_semaphore, #tpu.memory_space<semaphore_mem>>) attributes {dimension_semantics = [#tpu.dimension_semantics<parallel>], iteration_bounds = array<i64: 1>, scalar_prefetch = 1 : i64, scratch_operands = 3 : i64, tpu.core_type = #tpu.core_type<tc>, window_params = [{}, {pipeline_mode = #tpu.pipeline_mode<synchronous>, transform_indices = @transform_1, window_bounds = array<i64: 32, 128>}, {pipeline_mode = #tpu.pipeline_mode<synchronous>, transform_indices = @transform_2, window_bounds = array<i64: 1, 128>}, {pipeline_mode = #tpu.pipeline_mode<synchronous>, transform_indices = @transform_3, window_bounds = array<i64: 24, 128>}, {pipeline_mode = #tpu.pipeline_mode<synchronous>, transform_indices = @transform_4, window_bounds = array<i64: 1, 128>}, {transform_indices = @transform_5, window_bounds = array<i64: 8, 128>}]} {
    %c128_i32 = arith.constant 128 : i32
    %0 = arith.muli %arg0, %c128_i32 : i32
    %c0_i32 = arith.constant 0 : i32
    %c128_i32_0 = arith.constant 128 : i32
    %1 = arith.addi %c0_i32, %c128_i32_0 : i32
    %c1_i32 = arith.constant 1 : i32
    scf.for %arg11 = %c0_i32 to %1 step %c1_i32  : i32 {
      %c1_i32_47 = arith.constant 1 : i32
      %50 = arith.muli %arg11, %c1_i32_47 : i32
      %c0_i32_48 = arith.constant 0 : i32
      %51 = arith.addi %c0_i32_48, %50 : i32
      %52 = arith.addi %0, %51 : i32
      %53 = arith.index_cast %52 : i32 to index
      %54 = memref.load %arg1[%53] : memref<128xi32, #tpu.memory_space<smem>>
      %c0_i32_49 = arith.constant 0 : i32
      %c0_i32_50 = arith.constant 0 : i32
      %55 = tpu.memref_slice %arg2[%54, %c0_i32_50] : memref<32x32xf32, #tpu.memory_space<any>> -> memref<1x32xf32, #tpu.memory_space<any>>
      %56 = tpu.memref_squeeze %55 : memref<1x32xf32, #tpu.memory_space<any>> -> memref<32xf32, #tpu.memory_space<any>>
      %c0_i32_51 = arith.constant 0 : i32
      %57 = tpu.memref_slice %arg8[%51, %c0_i32_51] : memref<128x32xf32, #tpu.memory_space<vmem>> -> memref<1x32xf32, #tpu.memory_space<vmem>>
      %58 = tpu.memref_squeeze %57 : memref<1x32xf32, #tpu.memory_space<vmem>> -> memref<32xf32, #tpu.memory_space<vmem>>
      %59 = tpu.memref_slice %arg10[%c0_i32_49] : memref<1x!tpu.dma_semaphore, #tpu.memory_space<semaphore_mem>> -> memref<1x!tpu.dma_semaphore, #tpu.memory_space<semaphore_mem>>
      %60 = tpu.memref_squeeze %59 : memref<1x!tpu.dma_semaphore, #tpu.memory_space<semaphore_mem>> -> memref<!tpu.dma_semaphore, #tpu.memory_space<semaphore_mem>>
      tpu.enqueue_dma source(%56 : memref<32xf32, #tpu.memory_space<any>>) target(%58 : memref<32xf32, #tpu.memory_space<vmem>>) target_semaphore(%60 : memref<!tpu.dma_semaphore, #tpu.memory_space<semaphore_mem>>)
    }
    %c128_i32_1 = arith.constant 128 : i32
    %c0_i32_2 = arith.constant 0 : i32
    %c128_i32_3 = arith.constant 128 : i32
    %2 = arith.addi %c0_i32_2, %c128_i32_3 : i32
    %c1_i32_4 = arith.constant 1 : i32
    scf.for %arg11 = %c0_i32_2 to %2 step %c1_i32_4  : i32 {
      %c0_i32_47 = arith.constant 0 : i32
      %c0_i32_48 = arith.constant 0 : i32
      %c0_i32_49 = arith.constant 0 : i32
      %c0_i32_50 = arith.constant 0 : i32
      %50 = tpu.memref_slice %arg2[%c0_i32_47, %c0_i32_50] : memref<32x32xf32, #tpu.memory_space<any>> -> memref<1x32xf32, #tpu.memory_space<any>>
      %51 = tpu.memref_squeeze %50 : memref<1x32xf32, #tpu.memory_space<any>> -> memref<32xf32, #tpu.memory_space<any>>
      %c0_i32_51 = arith.constant 0 : i32
      %52 = tpu.memref_slice %arg8[%c0_i32_48, %c0_i32_51] : memref<128x32xf32, #tpu.memory_space<vmem>> -> memref<1x32xf32, #tpu.memory_space<vmem>>
      %53 = tpu.memref_squeeze %52 : memref<1x32xf32, #tpu.memory_space<vmem>> -> memref<32xf32, #tpu.memory_space<vmem>>
      %54 = tpu.memref_slice %arg10[%c0_i32_49] : memref<1x!tpu.dma_semaphore, #tpu.memory_space<semaphore_mem>> -> memref<1x!tpu.dma_semaphore, #tpu.memory_space<semaphore_mem>>
      %55 = tpu.memref_squeeze %54 : memref<1x!tpu.dma_semaphore, #tpu.memory_space<semaphore_mem>> -> memref<!tpu.dma_semaphore, #tpu.memory_space<semaphore_mem>>
      tpu.wait_dma2 semaphore(%55 : memref<!tpu.dma_semaphore, #tpu.memory_space<semaphore_mem>>) src(%51 : memref<32xf32, #tpu.memory_space<any>>) dst(%53 : memref<32xf32, #tpu.memory_space<vmem>>)
    }
    %c0 = arith.constant 0 : index
    %c0_5 = arith.constant 0 : index
    %3 = vector.load %arg8[%c0, %c0_5] : memref<128x32xf32, #tpu.memory_space<vmem>>, vector<128x32xf32>
    %4 = arith.truncf %3 : vector<128x32xf32> to vector<128x32xbf16>
    %c0_6 = arith.constant 0 : index
    %c0_7 = arith.constant 0 : index
    %5 = vector.load %arg3[%c0_6, %c0_7] : memref<32x128xbf16, #tpu.memory_space<vmem>>, vector<32x128xbf16>
    %cst = arith.constant dense<0.000000e+00> : vector<128x128xf32>
    %6 = tpu.matmul %4, %5, %cst {dimension_numbers = #tpu.dot_dimension_numbers<[1], [0], [0], [1], [0, 0, 1, 1], [], []>} : vector<128x32xbf16>, vector<32x128xbf16>, vector<128x128xf32> -> vector<128x128xf32>
    %c0_8 = arith.constant 0 : index
    %c0_9 = arith.constant 0 : index
    %7 = vector.load %arg4[%c0_8, %c0_9] : memref<1x128xf32, #tpu.memory_space<vmem>>, vector<1x128xf32>
    %8 = vector.broadcast %7 : vector<1x128xf32> to vector<128x128xf32>
    %9 = arith.addf %6, %8 : vector<128x128xf32>
    %10 = vector.shape_cast %9 : vector<128x128xf32> to vector<8x16x128xf32>
    %c0_10 = arith.constant 0 : index
    %c0_11 = arith.constant 0 : index
    %c0_12 = arith.constant 0 : index
    %11 = vector.load %arg9[%c0_10, %c0_11, %c0_12] : memref<8x16x128xf32, #tpu.memory_space<vmem>>, vector<8x16x128xf32>
    tpu.vector_store %arg9[%c0_10, %c0_11, %c0_12], %10 {strides = array<i32>} : memref<8x16x128xf32, #tpu.memory_space<vmem>>, vector<8x16x128xf32>,
    %c0_13 = arith.constant 0 : index
    %c0_14 = arith.constant 0 : index
    %c0_15 = arith.constant 0 : index
    %12 = vector.load %arg9[%c0_13, %c0_14, %c0_15] : memref<8x16x128xf32, #tpu.memory_space<vmem>>, vector<8x14x8xf32>
    %c0_16 = arith.constant 0 : index
    %c1 = arith.constant 1 : index
    %c8 = arith.constant 8 : index
    %13 = vector.load %arg9[%c0_16, %c1, %c8] : memref<8x16x128xf32, #tpu.memory_space<vmem>>, vector<8x14x8xf32>
    %14 = arith.addf %12, %13 : vector<8x14x8xf32>
    %c0_17 = arith.constant 0 : index
    %c2 = arith.constant 2 : index
    %c16 = arith.constant 16 : index
    %15 = vector.load %arg9[%c0_17, %c2, %c16] : memref<8x16x128xf32, #tpu.memory_space<vmem>>, vector<8x14x8xf32>
    %16 = arith.addf %14, %15 : vector<8x14x8xf32>
    %cst_18 = arith.constant 0.000000e+00 : f32
    %17 = vector.broadcast %cst_18 : f32 to vector<8x14x8xf32>
    %18 = arith.maximumf %16, %17 : vector<8x14x8xf32>
    %cst_19 = arith.constant dense<0xFF800000> : vector<8x8xf32>
    %19 = vector.multi_reduction <maximumf>, %18, %cst_19 [1] : vector<8x14x8xf32> to vector<8x8xf32>
    %c0_20 = arith.constant 0 : index
    %c0_21 = arith.constant 0 : index
    %c24 = arith.constant 24 : index
    %20 = vector.load %arg9[%c0_20, %c0_21, %c24] : memref<8x16x128xf32, #tpu.memory_space<vmem>>, vector<8x13x8xf32>
    %c0_22 = arith.constant 0 : index
    %c1_23 = arith.constant 1 : index
    %c32 = arith.constant 32 : index
    %21 = vector.load %arg9[%c0_22, %c1_23, %c32] : memref<8x16x128xf32, #tpu.memory_space<vmem>>, vector<8x13x8xf32>
    %22 = arith.addf %20, %21 : vector<8x13x8xf32>
    %c0_24 = arith.constant 0 : index
    %c2_25 = arith.constant 2 : index
    %c40 = arith.constant 40 : index
    %23 = vector.load %arg9[%c0_24, %c2_25, %c40] : memref<8x16x128xf32, #tpu.memory_space<vmem>>, vector<8x13x8xf32>
    %24 = arith.addf %22, %23 : vector<8x13x8xf32>
    %c0_26 = arith.constant 0 : index
    %c3 = arith.constant 3 : index
    %c48 = arith.constant 48 : index
    %25 = vector.load %arg9[%c0_26, %c3, %c48] : memref<8x16x128xf32, #tpu.memory_space<vmem>>, vector<8x13x8xf32>
    %26 = arith.addf %24, %25 : vector<8x13x8xf32>
    %cst_27 = arith.constant 0.000000e+00 : f32
    %27 = vector.broadcast %cst_27 : f32 to vector<8x13x8xf32>
    %28 = arith.maximumf %26, %27 : vector<8x13x8xf32>
    %cst_28 = arith.constant dense<0xFF800000> : vector<8x8xf32>
    %29 = vector.multi_reduction <maximumf>, %28, %cst_28 [1] : vector<8x13x8xf32> to vector<8x8xf32>
    %c0_29 = arith.constant 0 : index
    %c0_30 = arith.constant 0 : index
    %c56 = arith.constant 56 : index
    %30 = vector.load %arg9[%c0_29, %c0_30, %c56] : memref<8x16x128xf32, #tpu.memory_space<vmem>>, vector<8x12x8xf32>
    %c0_31 = arith.constant 0 : index
    %c1_32 = arith.constant 1 : index
    %c64 = arith.constant 64 : index
    %31 = vector.load %arg9[%c0_31, %c1_32, %c64] : memref<8x16x128xf32, #tpu.memory_space<vmem>>, vector<8x12x8xf32>
    %32 = arith.addf %30, %31 : vector<8x12x8xf32>
    %c0_33 = arith.constant 0 : index
    %c2_34 = arith.constant 2 : index
    %c72 = arith.constant 72 : index
    %33 = vector.load %arg9[%c0_33, %c2_34, %c72] : memref<8x16x128xf32, #tpu.memory_space<vmem>>, vector<8x12x8xf32>
    %34 = arith.addf %32, %33 : vector<8x12x8xf32>
    %c0_35 = arith.constant 0 : index
    %c3_36 = arith.constant 3 : index
    %c80 = arith.constant 80 : index
    %35 = vector.load %arg9[%c0_35, %c3_36, %c80] : memref<8x16x128xf32, #tpu.memory_space<vmem>>, vector<8x12x8xf32>
    %36 = arith.addf %34, %35 : vector<8x12x8xf32>
    %c0_37 = arith.constant 0 : index
    %c4 = arith.constant 4 : index
    %c88 = arith.constant 88 : index
    %37 = vector.load %arg9[%c0_37, %c4, %c88] : memref<8x16x128xf32, #tpu.memory_space<vmem>>, vector<8x12x8xf32>
    %38 = arith.addf %36, %37 : vector<8x12x8xf32>
    %cst_38 = arith.constant 0.000000e+00 : f32
    %39 = vector.broadcast %cst_38 : f32 to vector<8x12x8xf32>
    %40 = arith.maximumf %38, %39 : vector<8x12x8xf32>
    %cst_39 = arith.constant dense<0xFF800000> : vector<8x8xf32>
    %41 = vector.multi_reduction <maximumf>, %40, %cst_39 [1] : vector<8x12x8xf32> to vector<8x8xf32>
    %42 = tpu.concatenate %19, %29, %41 in 1 : vector<8x8xf32>, vector<8x8xf32>, vector<8x8xf32> -> vector<8x24xf32>
    %43 = arith.truncf %42 : vector<8x24xf32> to vector<8x24xbf16>
    %c0_40 = arith.constant 0 : index
    %c0_41 = arith.constant 0 : index
    %44 = vector.load %arg5[%c0_40, %c0_41] : memref<24x128xbf16, #tpu.memory_space<vmem>>, vector<24x128xbf16>
    %cst_42 = arith.constant dense<0.000000e+00> : vector<8x128xf32>
    %45 = tpu.matmul %43, %44, %cst_42 {dimension_numbers = #tpu.dot_dimension_numbers<[1], [0], [0], [1], [0, 0, 1, 1], [], []>} : vector<8x24xbf16>, vector<24x128xbf16>, vector<8x128xf32> -> vector<8x128xf32>
    %c0_43 = arith.constant 0 : index
    %c0_44 = arith.constant 0 : index
    %46 = vector.load %arg6[%c0_43, %c0_44] : memref<1x128xf32, #tpu.memory_space<vmem>>, vector<1x128xf32>
    %47 = vector.broadcast %46 : vector<1x128xf32> to vector<8x128xf32>
    %48 = arith.addf %45, %47 : vector<8x128xf32>
    %c0_45 = arith.constant 0 : index
    %c0_46 = arith.constant 0 : index
    %49 = vector.load %arg7[%c0_45, %c0_46] : memref<8x128xf32, #tpu.memory_space<vmem>>, vector<8x128xf32>
    tpu.vector_store %arg7[%c0_45, %c0_46], %48 {strides = array<i32>} : memref<8x128xf32, #tpu.memory_space<vmem>>, vector<8x128xf32>,
    return
  }
  func.func @transform_1(%arg0: i32, %arg1: memref<128xi32, #tpu.memory_space<smem>>) -> (i32, i32) {
    %c0_i32 = arith.constant 0 : i32
    %c0_i32_0 = arith.constant 0 : i32
    %c0_i32_1 = arith.constant 0 : i32
    return %c0_i32, %c0_i32_0 : i32, i32
  }
  func.func @transform_2(%arg0: i32, %arg1: memref<128xi32, #tpu.memory_space<smem>>) -> (i32, i32) {
    %c0_i32 = arith.constant 0 : i32
    %c0_i32_0 = arith.constant 0 : i32
    %c0_i32_1 = arith.constant 0 : i32
    return %c0_i32, %c0_i32_0 : i32, i32
  }
  func.func @transform_3(%arg0: i32, %arg1: memref<128xi32, #tpu.memory_space<smem>>) -> (i32, i32) {
    %c0_i32 = arith.constant 0 : i32
    %c0_i32_0 = arith.constant 0 : i32
    %c0_i32_1 = arith.constant 0 : i32
    return %c0_i32, %c0_i32_0 : i32, i32
  }
  func.func @transform_4(%arg0: i32, %arg1: memref<128xi32, #tpu.memory_space<smem>>) -> (i32, i32) {
    %c0_i32 = arith.constant 0 : i32
    %c0_i32_0 = arith.constant 0 : i32
    %c0_i32_1 = arith.constant 0 : i32
    return %c0_i32, %c0_i32_0 : i32, i32
  }
  func.func @transform_5(%arg0: i32, %arg1: memref<128xi32, #tpu.memory_space<smem>>) -> (i32, i32) {
    %c0_i32 = arith.constant 0 : i32
    %c0_i32_0 = arith.constant 0 : i32
    return %arg0, %c0_i32 : i32, i32
  }
}

</mosaic_0001>

<llo_original>
// kernel: textcnn_forward.1
$region0: #{textcnn_forward.1}
  #allocation0 [shape = 'u32[]', space=smem, size = 0x4, offset = 0x4, fixed_abs, tag = 'smem constant byte address 0x4 - core index']
  #allocation1 [shape = 'u32[72,128]{1,0:T(1,128)}', space=vmem, size = 0x9000, scoped, tag = 'internal scratch']
  #allocation2 [shape = 'f32[128,32]{1,0:T(8,128)}', space=vmem, size = 0x10000, scoped, tag = 'scratch operand']
  #allocation3 [shape = 'f32[8,16,128]{2,1,0:T(8,128)}', space=vmem, size = 0x10000, scoped, tag = 'scratch operand']
  #allocation4 [shape = 's32[1]{0}', space=sflag, size = 0x4, scoped, tag = 'scratch operand']
  #allocation5 [shape = 's32[1]{0}', space=sflag, size = 0x4, scoped, tag = 'scoped memory for textcnn_forward.1']
  #allocation6 [shape = 'u8[512]{0}', space=smem, size = 0x200, scoped, tag = 'prefetched SMEM operand 0']
  #allocation7 [shape = 's32[]', space=sflag, size = 0x4, offset = 0, fixed_abs, tag = 'sflag constant byte address 0x0 - dummy sync flag']
  %s0 = inlined_call_operand.vmem [shape: s32[128], index: 0, kind: input, shape index: {}]
  %s1 = inlined_call_operand.vmem [shape: f32[32,32], index: 1, kind: input, shape index: {}]
  %s2 = inlined_call_operand.vmem [shape: bf16[32,128], index: 2, kind: input, shape index: {}]
  %s3 = inlined_call_operand.vmem [shape: f32[1,128], index: 3, kind: input, shape index: {}]
  %s4 = inlined_call_operand.vmem [shape: bf16[24,128], index: 4, kind: input, shape index: {}]
  %s5 = inlined_call_operand.vmem [shape: f32[1,128], index: 5, kind: input, shape index: {}]
  %s6 = inlined_call_operand.vmem [shape: f32[8,128], index: 6, kind: output, shape index: {}]
  %s7 = sld [smem:[#allocation0]]
  $region70: #{textcnn_forward.1} parent=0
    _
  %s9 = ssub.s32 1, %s7
  %s10 = scalar_select 0, %s9, %s7
  %s12 = sshll.u32 %s0, 4
  %s13 = int_to_ptr.vmem [resolvable:$true] %s12
  %15 = dma.vmem_to_smem %s13, 16, [#allocation6], [#allocation5]
  %17 = dma.done [#allocation5], 16
  %18 = sfence
  // Predicated region
  $region2: #{textcnn_forward.1} parent=0 // pred_check
    _
  $region3: #{textcnn_forward.1} parent=0 // pred_check_branch
    %20 = sbr.rel (0) target = $region5
  $region4: #{textcnn_forward.1} parent=0 // pred_region
    _
  $region5: #{textcnn_forward.1} parent=0 // pred_fallthru
    _
  // Predicated region
  $region6: #{textcnn_forward.1} parent=0 // pred_check
    _
  $region7: #{textcnn_forward.1} parent=0 // pred_check_branch
    %22 = sbr.rel (0) target = $region9
  $region8: #{textcnn_forward.1} parent=0 // pred_region
    _
  $region9: #{textcnn_forward.1} parent=0 // pred_fallthru
    _
  // Predicated region
  $region10: #{textcnn_forward.1} parent=0 // pred_check
    _
  $region11: #{textcnn_forward.1} parent=0 // pred_check_branch
    %24 = sbr.rel (0) target = $region13
  $region12: #{textcnn_forward.1} parent=0 // pred_region
    _
  $region13: #{textcnn_forward.1} parent=0 // pred_fallthru
    _
  // Predicated region
  $region14: #{textcnn_forward.1} parent=0 // pred_check
    _
  $region15: #{textcnn_forward.1} parent=0 // pred_check_branch
    %26 = sbr.rel (0) target = $region17
  $region16: #{textcnn_forward.1} parent=0 // pred_region
    _
  $region17: #{textcnn_forward.1} parent=0 // pred_fallthru
    _
  %s28 = smul.u32 0, 128
  loop: start=0, step=1, limit=128
  $region18: #{textcnn_forward.1} parent=0 // loop_pre_header
    _
  $region19: #{textcnn_forward.1} parent=0 // loop_header
    %s30 = sphi 0, %s34
    %p31 = scmp.ge.s32.totalorder %s30, 128
  $region20: #{textcnn_forward.1} parent=0 // loop_header_branch
    %33 = sbr.rel (%p31) target = $region24
  $region21: #{textcnn_forward.1} parent=0 // loop_body
    %s35 = sadd.s32 %s28, %s30
    %s36 = sld [smem:[#allocation6 + %s35]]
    %s37 = scalar_lea.vmem %s1, %s36
    %s38 = scalar_lea.vmem [#allocation2], %s30
    // Predicated region
    $region25: #{textcnn_forward.1} parent=21 // pred_check
      _
    $region26: #{textcnn_forward.1} parent=21 // pred_check_branch
      %40 = sbr.rel target = $region28
    $region27: #{textcnn_forward.1} parent=21 // pred_region
      // Predicated region
      $region40: #{textcnn_forward.1} parent=27 // pred_check
        _
      $region41: #{textcnn_forward.1} parent=27 // pred_check_branch
        %56 = sbr.rel (0) target = $region43
      $region42: #{textcnn_forward.1} parent=27 // pred_region
        %s58 = ssub.s32 2, 1
        loop: start=0, step=1, limit=1
        $region44: #{textcnn_forward.1} parent=42 // loop_pre_header
          _
        $region45: #{textcnn_forward.1} parent=42 // loop_header
          %s60 = sphi 0, %s64
          %p61 = scmp.ge.s32.totalorder %s60, 1
          %s65 = sphi %s37, %s37
          %s66 = sphi %s38, %s38
        $region46: #{textcnn_forward.1} parent=42 // loop_header_branch
          %63 = sbr.rel (%p61) target = $region50
        $region47: #{textcnn_forward.1} parent=42 // loop_body
          %v67 = vld [vmem:[%s65] sm:%s58]
          %68 = vst [vmem:[%s66] sm:%s58] %v67
        $region48: #{textcnn_forward.1} parent=42 // loop_footer
          %s64 = sadd.s32 1, %s60
        $region49: #{textcnn_forward.1} parent=42 // loop_footer_branch
          %59 = sbr.rel target = $region45
        $region50: #{textcnn_forward.1} parent=42 // loop_exit
          _
      $region43: #{textcnn_forward.1} parent=27 // pred_fallthru
        _
    $region28: #{textcnn_forward.1} parent=21 // pred_fallthru
      _
    // Predicated region
    $region29: #{textcnn_forward.1} parent=21 // pred_check
      _
    $region30: #{textcnn_forward.1} parent=21 // pred_check_branch
      %42 = sbr.rel (0) target = $region32
    $region31: #{textcnn_forward.1} parent=21 // pred_region
      %s44 = ssub.s32 2, 1
      loop: start=0, step=1, limit=1
      $region33: #{textcnn_forward.1} parent=31 // loop_pre_header
        _
      $region34: #{textcnn_forward.1} parent=31 // loop_header
        %s46 = sphi 0, %s50
        %p47 = scmp.ge.s32.totalorder %s46, 1
        %s51 = sphi %s37, %s37
        %s52 = sphi %s38, %s38
      $region35: #{textcnn_forward.1} parent=31 // loop_header_branch
        %49 = sbr.rel (%p47) target = $region39
      $region36: #{textcnn_forward.1} parent=31 // loop_body
        %v53 = vld [vmem:[%s51] sm:%s44]
        %54 = vst [vmem:[%s52] sm:%s44] %v53
      $region37: #{textcnn_forward.1} parent=31 // loop_footer
        %s50 = sadd.s32 1, %s46
      $region38: #{textcnn_forward.1} parent=31 // loop_footer_branch
        %45 = sbr.rel target = $region34
      $region39: #{textcnn_forward.1} parent=31 // loop_exit
        _
    $region32: #{textcnn_forward.1} parent=21 // pred_fallthru
      _
    // Predicated region
    $region51: #{textcnn_forward.1} parent=21 // pred_check
      _
    $region52: #{textcnn_forward.1} parent=21 // pred_check_branch
      %71 = sbr.rel (0) target = $region54
    $region53: #{textcnn_forward.1} parent=21 // pred_region
      %72 = vsyncadd [#allocation4], 16
    $region54: #{textcnn_forward.1} parent=21 // pred_fallthru
      _
  $region22: #{textcnn_forward.1} parent=0 // loop_footer
    %s34 = sadd.s32 1, %s30
  $region23: #{textcnn_forward.1} parent=0 // loop_footer_branch
    %29 = sbr.rel target = $region19
  $region24: #{textcnn_forward.1} parent=0 // loop_exit
    _
  loop: start=0, step=1, limit=128
  $region55: #{textcnn_forward.1} parent=0 // loop_pre_header
    _
  $region56: #{textcnn_forward.1} parent=0 // loop_header
    %s74 = sphi 0, %s78
    %p75 = scmp.ge.s32.totalorder %s74, 128
  $region57: #{textcnn_forward.1} parent=0 // loop_header_branch
    %77 = sbr.rel (%p75) target = $region61
  $region58: #{textcnn_forward.1} parent=0 // loop_body
    %80 = dma.done [#allocation4], 16
  $region59: #{textcnn_forward.1} parent=0 // loop_footer
    %s78 = sadd.s32 1, %s74
  $region60: #{textcnn_forward.1} parent=0 // loop_footer_branch
    %73 = sbr.rel target = $region56
  $region61: #{textcnn_forward.1} parent=0 // loop_exit
    _
  %v81 = vld [vmem:[#allocation2] sm:$0xff]
  %v82 = vld [vmem:[#allocation2 + $0x8] sm:$0xff]
  %v83 = vld [vmem:[#allocation2 + $0x10] sm:$0xff]
  %v84 = vld [vmem:[#allocation2 + $0x18] sm:$0xff]
  %v85 = vld [vmem:[#allocation2 + $0x20] sm:$0xff]
  %v86 = vld [vmem:[#allocation2 + $0x28] sm:$0xff]
  %v87 = vld [vmem:[#allocation2 + $0x30] sm:$0xff]
  %v88 = vld [vmem:[#allocation2 + $0x38] sm:$0xff]
  %v89 = vld [vmem:[#allocation2 + $0x40] sm:$0xff]
  %v90 = vld [vmem:[#allocation2 + $0x48] sm:$0xff]
  %v91 = vld [vmem:[#allocation2 + $0x50] sm:$0xff]
  %v92 = vld [vmem:[#allocation2 + $0x58] sm:$0xff]
  %v93 = vld [vmem:[#allocation2 + $0x60] sm:$0xff]
  %v94 = vld [vmem:[#allocation2 + $0x68] sm:$0xff]
  %v95 = vld [vmem:[#allocation2 + $0x70] sm:$0xff]
  %v96 = vld [vmem:[#allocation2 + $0x78] sm:$0xff]
  %v97 = vpack.c.bf16 %v82, %v81
  %v98 = vpack.c.bf16 %v84, %v83
  %v99 = vpack.c.bf16 %v86, %v85
  %v100 = vpack.c.bf16 %v88, %v87
  %v101 = vpack.c.bf16 %v90, %v89
  %v102 = vpack.c.bf16 %v92, %v91
  %v103 = vpack.c.bf16 %v94, %v93
  %v104 = vpack.c.bf16 %v96, %v95
  %v105 = vld [vmem:[%s2] sm:$0xf]
  %v106 = vld [vmem:[%s2 + $0x4] sm:$0xf]
  %v107 = vld [vmem:[%s2 + $0x8] sm:$0xf]
  %v108 = vld [vmem:[%s2 + $0xc] sm:$0xf]
  %v109 = vld [vmem:[%s3] sm:$0x1]
  %v111 = vperm.slane %v109, 0
  %v117 = vunpack.c.l.b16 %v105
  %v118 = vunpack.c.l.b16 %v106
  %v119 = vunpack.c.l.b16 %v107
  %v120 = vunpack.c.l.b16 %v108
  %v121 = vpack.c.b16 %v118, %v117
  %v122 = vpack.c.b16 %v120, %v119
  %vm125 = vcmask 261120
  %v127 = vsel %vm125, %v97, 0
  %v130 = vsel %vm125, %v98, 0
  %v133 = vsel %vm125, %v99, 0
  %v136 = vsel %vm125, %v100, 0
  %v139 = vsel %vm125, %v101, 0
  %v142 = vsel %vm125, %v102, 0
  %v145 = vsel %vm125, %v103, 0
  %v148 = vsel %vm125, %v104, 0
  %150 = vmatpush.bf16.msra.mxu0 0
  %151 = vmatpush.bf16.msra.mxu0 0
  %152 = vmatpush.bf16.msra.mxu0 0
  %153 = vmatpush.bf16.msra.mxu0 0
  %154 = vmatpush.bf16.msra.mxu0 0
  %155 = vmatpush.bf16.msra.mxu0 0
  %156 = vmatpush.bf16.msra.mxu0 %v122
  %157 = vmatpush.bf16.msra.mxu0 %v121
  %158 = vmatmul.bf16.gmra.mxu0 %v127
  %v159 = vpop.f32.mrf.mxu0
  %v160 = vadd.f32 %v111, %v159
  %v161 = vpop.f32.mrf.mxu0
  %v162 = vadd.f32 %v111, %v161
  %163 = vmatmul.bf16.gmra.mxu0 %v130
  %v164 = vpop.f32.mrf.mxu0
  %v165 = vadd.f32 %v111, %v164
  %v166 = vpop.f32.mrf.mxu0
  %v167 = vadd.f32 %v111, %v166
  %168 = vmatmul.bf16.gmra.mxu0 %v133
  %v169 = vpop.f32.mrf.mxu0
  %v170 = vadd.f32 %v111, %v169
  %v171 = vpop.f32.mrf.mxu0
  %v172 = vadd.f32 %v111, %v171
  %173 = vmatmul.bf16.gmra.mxu0 %v136
  %v174 = vpop.f32.mrf.mxu0
  %v175 = vadd.f32 %v111, %v174
  %v176 = vpop.f32.mrf.mxu0
  %v177 = vadd.f32 %v111, %v176
  %178 = vmatmul.bf16.gmra.mxu0 %v139
  %v179 = vpop.f32.mrf.mxu0
  %v180 = vadd.f32 %v111, %v179
  %v181 = vpop.f32.mrf.mxu0
  %v182 = vadd.f32 %v111, %v181
  %183 = vmatmul.bf16.gmra.mxu0 %v142
  %v184 = vpop.f32.mrf.mxu0
  %v185 = vadd.f32 %v111, %v184
  %v186 = vpop.f32.mrf.mxu0
  %v187 = vadd.f32 %v111, %v186
  %188 = vmatmul.bf16.gmra.mxu0 %v145
  %v189 = vpop.f32.mrf.mxu0
  %v190 = vadd.f32 %v111, %v189
  %v191 = vpop.f32.mrf.mxu0
  %v192 = vadd.f32 %v111, %v191
  %193 = vmatmul.bf16.gmra.mxu0 %v148
  %v194 = vpop.f32.mrf.mxu0
  %v195 = vadd.f32 %v111, %v194
  %v196 = vpop.f32.mrf.mxu0
  %v197 = vadd.f32 %v111, %v196
  %198 = vdwg.mxu0
  %199 = vst [vmem:[#allocation3] sm:$0xff] %v160
  %200 = vst [vmem:[#allocation3 + $0x8] sm:$0xff] %v162
  %201 = vst [vmem:[#allocation3 + $0x10] sm:$0xff] %v165
  %202 = vst [vmem:[#allocation3 + $0x18] sm:$0xff] %v167
  %203 = vst [vmem:[#allocation3 + $0x20] sm:$0xff] %v170
  %204 = vst [vmem:[#allocation3 + $0x28] sm:$0xff] %v172
  %205 = vst [vmem:[#allocation3 + $0x30] sm:$0xff] %v175
  %206 = vst [vmem:[#allocation3 + $0x38] sm:$0xff] %v177
  %207 = vst [vmem:[#allocation3 + $0x40] sm:$0xff] %v180
  %208 = vst [vmem:[#allocation3 + $0x48] sm:$0xff] %v182
  %209 = vst [vmem:[#allocation3 + $0x50] sm:$0xff] %v185
  %210 = vst [vmem:[#allocation3 + $0x58] sm:$0xff] %v187
  %211 = vst [vmem:[#allocation3 + $0x60] sm:$0xff] %v190
  %212 = vst [vmem:[#allocation3 + $0x68] sm:$0xff] %v192
  %213 = vst [vmem:[#allocation3 + $0x70] sm:$0xff] %v195
  %214 = vst [vmem:[#allocation3 + $0x78] sm:$0xff] %v197
  %v215 = vld [vmem:[#allocation3] sm:$0xff]
  %v216 = vld [vmem:[#allocation3 + $0x8] sm:$0x3f]
  %v217 = vld [vmem:[#allocation3 + $0x10] sm:$0xff]
  %v218 = vld [vmem:[#allocation3 + $0x18] sm:$0x3f]
  %v219 = vld [vmem:[#allocation3 + $0x20] sm:$0xff]
  %v220 = vld [vmem:[#allocation3 + $0x28] sm:$0x3f]
  %v221 = vld [vmem:[#allocation3 + $0x30] sm:$0xff]
  %v222 = vld [vmem:[#allocation3 + $0x38] sm:$0x3f]
  %v223 = vld [vmem:[#allocation3 + $0x40] sm:$0xff]
  %v224 = vld [vmem:[#allocation3 + $0x48] sm:$0x3f]
  %v225 = vld [vmem:[#allocation3 + $0x50] sm:$0xff]
  %v226 = vld [vmem:[#allocation3 + $0x58] sm:$0x3f]
  %v227 = vld [vmem:[#allocation3 + $0x60] sm:$0xff]
  %v228 = vld [vmem:[#allocation3 + $0x68] sm:$0x3f]
  %v229 = vld [vmem:[#allocation3 + $0x70] sm:$0xff]
  %v230 = vld [vmem:[#allocation3 + $0x78] sm:$0x3f]
  %v231 = vld [vmem:[#allocation3 + $0x1] sm:$0xff]
  %v232 = vld [vmem:[#allocation3 + $0x9] sm:$0x3f]
  %v233 = vld [vmem:[#allocation3 + $0x11] sm:$0xff]
  %v234 = vld [vmem:[#allocation3 + $0x19] sm:$0x3f]
  %v235 = vld [vmem:[#allocation3 + $0x21] sm:$0xff]
  %v236 = vld [vmem:[#allocation3 + $0x29] sm:$0x3f]
  %v237 = vld [vmem:[#allocation3 + $0x31] sm:$0xff]
  %v238 = vld [vmem:[#allocation3 + $0x39] sm:$0x3f]
  %v239 = vld [vmem:[#allocation3 + $0x41] sm:$0xff]
  %v240 = vld [vmem:[#allocation3 + $0x49] sm:$0x3f]
  %v241 = vld [vmem:[#allocation3 + $0x51] sm:$0xff]
  %v242 = vld [vmem:[#allocation3 + $0x59] sm:$0x3f]
  %v243 = vld [vmem:[#allocation3 + $0x61] sm:$0xff]
  %v244 = vld [vmem:[#allocation3 + $0x69] sm:$0x3f]
  %v245 = vld [vmem:[#allocation3 + $0x71] sm:$0xff]
  %v246 = vld [vmem:[#allocation3 + $0x79] sm:$0x3f]
  %263 = vrot.lane.b32.xlu0 %v231, 120
  %v264 = vpop.permute.xlu0 %263
  %265 = vrot.lane.b32.xlu0 %v232, 120
  %v266 = vpop.permute.xlu0 %265
  %267 = vrot.lane.b32.xlu0 %v233, 120
  %v268 = vpop.permute.xlu0 %267
  %269 = vrot.lane.b32.xlu0 %v234, 120
  %v270 = vpop.permute.xlu0 %269
  %271 = vrot.lane.b32.xlu0 %v235, 120
  %v272 = vpop.permute.xlu0 %271
  %273 = vrot.lane.b32.xlu0 %v236, 120
  %v274 = vpop.permute.xlu0 %273
  %275 = vrot.lane.b32.xlu0 %v237, 120
  %v276 = vpop.permute.xlu0 %275
  %277 = vrot.lane.b32.xlu0 %v238, 120
  %v278 = vpop.permute.xlu0 %277
  %279 = vrot.lane.b32.xlu0 %v239, 120
  %v280 = vpop.permute.xlu0 %279
  %281 = vrot.lane.b32.xlu0 %v240, 120
  %v282 = vpop.permute.xlu0 %281
  %283 = vrot.lane.b32.xlu0 %v241, 120
  %v284 = vpop.permute.xlu0 %283
  %285 = vrot.lane.b32.xlu0 %v242, 120
  %v286 = vpop.permute.xlu0 %285
  %287 = vrot.lane.b32.xlu0 %v243, 120
  %v288 = vpop.permute.xlu0 %287
  %289 = vrot.lane.b32.xlu0 %v244, 120
  %v290 = vpop.permute.xlu0 %289
  %291 = vrot.lane.b32.xlu0 %v245, 120
  %v292 = vpop.permute.xlu0 %291
  %293 = vrot.lane.b32.xlu0 %v246, 120
  %v294 = vpop.permute.xlu0 %293
  %v311 = vadd.f32 %v215, %v264
  %v312 = vadd.f32 %v216, %v266
  %v313 = vadd.f32 %v217, %v268
  %v314 = vadd.f32 %v218, %v270
  %v315 = vadd.f32 %v219, %v272
  %v316 = vadd.f32 %v220, %v274
  %v317 = vadd.f32 %v221, %v276
  %v318 = vadd.f32 %v222, %v278
  %v319 = vadd.f32 %v223, %v280
  %v320 = vadd.f32 %v224, %v282
  %v321 = vadd.f32 %v225, %v284
  %v322 = vadd.f32 %v226, %v286
  %v323 = vadd.f32 %v227, %v288
  %v324 = vadd.f32 %v228, %v290
  %v325 = vadd.f32 %v229, %v292
  %v326 = vadd.f32 %v230, %v294
  %v327 = vld [vmem:[#allocation3 + $0x2] sm:$0xff]
  %v328 = vld [vmem:[#allocation3 + $0xa] sm:$0x3f]
  %v329 = vld [vmem:[#allocation3 + $0x12] sm:$0xff]
  %v330 = vld [vmem:[#allocation3 + $0x1a] sm:$0x3f]
  %v331 = vld [vmem:[#allocation3 + $0x22] sm:$0xff]
  %v332 = vld [vmem:[#allocation3 + $0x2a] sm:$0x3f]
  %v333 = vld [vmem:[#allocation3 + $0x32] sm:$0xff]
  %v334 = vld [vmem:[#allocation3 + $0x3a] sm:$0x3f]
  %v335 = vld [vmem:[#allocation3 + $0x42] sm:$0xff]
  %v336 = vld [vmem:[#allocation3 + $0x4a] sm:$0x3f]
  %v337 = vld [vmem:[#allocation3 + $0x52] sm:$0xff]
  %v338 = vld [vmem:[#allocation3 + $0x5a] sm:$0x3f]
  %v339 = vld [vmem:[#allocation3 + $0x62] sm:$0xff]
  %v340 = vld [vmem:[#allocation3 + $0x6a] sm:$0x3f]
  %v341 = vld [vmem:[#allocation3 + $0x72] sm:$0xff]
  %v342 = vld [vmem:[#allocation3 + $0x7a] sm:$0x3f]
  %359 = vrot.lane.b32.xlu0 %v327, 112
  %v360 = vpop.permute.xlu0 %359
  %361 = vrot.lane.b32.xlu0 %v328, 112
  %v362 = vpop.permute.xlu0 %361
  %363 = vrot.lane.b32.xlu0 %v329, 112
  %v364 = vpop.permute.xlu0 %363
  %365 = vrot.lane.b32.xlu0 %v330, 112
  %v366 = vpop.permute.xlu0 %365
  %367 = vrot.lane.b32.xlu0 %v331, 112
  %v368 = vpop.permute.xlu0 %367
  %369 = vrot.lane.b32.xlu0 %v332, 112
  %v370 = vpop.permute.xlu0 %369
  %371 = vrot.lane.b32.xlu0 %v333, 112
  %v372 = vpop.permute.xlu0 %371
  %373 = vrot.lane.b32.xlu0 %v334, 112
  %v374 = vpop.permute.xlu0 %373
  %375 = vrot.lane.b32.xlu0 %v335, 112
  %v376 = vpop.permute.xlu0 %375
  %377 = vrot.lane.b32.xlu0 %v336, 112
  %v378 = vpop.permute.xlu0 %377
  %379 = vrot.lane.b32.xlu0 %v337, 112
  %v380 = vpop.permute.xlu0 %379
  %381 = vrot.lane.b32.xlu0 %v338, 112
  %v382 = vpop.permute.xlu0 %381
  %383 = vrot.lane.b32.xlu0 %v339, 112
  %v384 = vpop.permute.xlu0 %383
  %385 = vrot.lane.b32.xlu0 %v340, 112
  %v386 = vpop.permute.xlu0 %385
  %387 = vrot.lane.b32.xlu0 %v341, 112
  %v388 = vpop.permute.xlu0 %387
  %389 = vrot.lane.b32.xlu0 %v342, 112
  %v390 = vpop.permute.xlu0 %389
  %v407 = vadd.f32 %v311, %v360
  %v408 = vadd.f32 %v312, %v362
  %v409 = vadd.f32 %v313, %v364
  %v410 = vadd.f32 %v314, %v366
  %v411 = vadd.f32 %v315, %v368
  %v412 = vadd.f32 %v316, %v370
  %v413 = vadd.f32 %v317, %v372
  %v414 = vadd.f32 %v318, %v374
  %v415 = vadd.f32 %v319, %v376
  %v416 = vadd.f32 %v320, %v378
  %v417 = vadd.f32 %v321, %v380
  %v418 = vadd.f32 %v322, %v382
  %v419 = vadd.f32 %v323, %v384
  %v420 = vadd.f32 %v324, %v386
  %v421 = vadd.f32 %v325, %v388
  %v422 = vadd.f32 %v326, %v390
  %v423 = vmax.f32 %v407, 0.0
  %v424 = vmax.f32 %v408, 0.0
  %v425 = vmax.f32 %v409, 0.0
  %v426 = vmax.f32 %v410, 0.0
  %v427 = vmax.f32 %v411, 0.0
  %v428 = vmax.f32 %v412, 0.0
  %v429 = vmax.f32 %v413, 0.0
  %v430 = vmax.f32 %v414, 0.0
  %v431 = vmax.f32 %v415, 0.0
  %v432 = vmax.f32 %v416, 0.0
  %v433 = vmax.f32 %v417, 0.0
  %v434 = vmax.f32 %v418, 0.0
  %v435 = vmax.f32 %v419, 0.0
  %v436 = vmax.f32 %v420, 0.0
  %v437 = vmax.f32 %v421, 0.0
  %v438 = vmax.f32 %v422, 0.0
  %vm439 = vcmask 64512
  %v440 = vsel %vm439, %v423, -inf
  %vm441 = vcmask 62464
  %v442 = vsel %vm441, %v424, -inf
  %v443 = vmax.f32 %v440, %v442
  %v444 = vrot.slane %v443, 4
  %v445 = vmax.f32 %v443, %v444
  %v446 = vrot.slane %v445, 2
  %v447 = vmax.f32 %v445, %v446
  %v448 = vrot.slane %v447, 1
  %v449 = vmax.f32 %v447, %v448
  %v450 = vsel %vm439, %v425, -inf
  %v451 = vsel %vm441, %v426, -inf
  %v452 = vmax.f32 %v450, %v451
  %v453 = vrot.slane %v452, 4
  %v454 = vmax.f32 %v452, %v453
  %v455 = vrot.slane %v454, 2
  %v456 = vmax.f32 %v454, %v455
  %v457 = vrot.slane %v456, 1
  %v458 = vmax.f32 %v456, %v457
  %v459 = vsel %vm439, %v427, -inf
  %v460 = vsel %vm441, %v428, -inf
  %v461 = vmax.f32 %v459, %v460
  %v462 = vrot.slane %v461, 4
  %v463 = vmax.f32 %v461, %v462
  %v464 = vrot.slane %v463, 2
  %v465 = vmax.f32 %v463, %v464
  %v466 = vrot.slane %v465, 1
  %v467 = vmax.f32 %v465, %v466
  %v468 = vsel %vm439, %v429, -inf
  %v469 = vsel %vm441, %v430, -inf
  %v470 = vmax.f32 %v468, %v469
  %v471 = vrot.slane %v470, 4
  %v472 = vmax.f32 %v470, %v471
  %v473 = vrot.slane %v472, 2
  %v474 = vmax.f32 %v472, %v473
  %v475 = vrot.slane %v474, 1
  %v476 = vmax.f32 %v474, %v475
  %v477 = vsel %vm439, %v431, -inf
  %v478 = vsel %vm441, %v432, -inf
  %v479 = vmax.f32 %v477, %v478
  %v480 = vrot.slane %v479, 4
  %v481 = vmax.f32 %v479, %v480
  %v482 = vrot.slane %v481, 2
  %v483 = vmax.f32 %v481, %v482
  %v484 = vrot.slane %v483, 1
  %v485 = vmax.f32 %v483, %v484
  %v486 = vsel %vm439, %v433, -inf
  %v487 = vsel %vm441, %v434, -inf
  %v488 = vmax.f32 %v486, %v487
  %v489 = vrot.slane %v488, 4
  %v490 = vmax.f32 %v488, %v489
  %v491 = vrot.slane %v490, 2
  %v492 = vmax.f32 %v490, %v491
  %v493 = vrot.slane %v492, 1
  %v494 = vmax.f32 %v492, %v493
  %v495 = vsel %vm439, %v435, -inf
  %v496 = vsel %vm441, %v436, -inf
  %v497 = vmax.f32 %v495, %v496
  %v498 = vrot.slane %v497, 4
  %v499 = vmax.f32 %v497, %v498
  %v500 = vrot.slane %v499, 2
  %v501 = vmax.f32 %v499, %v500
  %v502 = vrot.slane %v501, 1
  %v503 = vmax.f32 %v501, %v502
  %v504 = vsel %vm439, %v437, -inf
  %v505 = vsel %vm441, %v438, -inf
  %v506 = vmax.f32 %v504, %v505
  %v507 = vrot.slane %v506, 4
  %v508 = vmax.f32 %v506, %v507
  %v509 = vrot.slane %v508, 2
  %v510 = vmax.f32 %v508, %v509
  %v511 = vrot.slane %v510, 1
  %v512 = vmax.f32 %v510, %v511
  %v513 = vld [vmem:[#allocation3 + $0x8] sm:$0x1f]
  %v514 = vld [vmem:[#allocation3 + $0x18] sm:$0x1f]
  %v515 = vld [vmem:[#allocation3 + $0x28] sm:$0x1f]
  %v516 = vld [vmem:[#allocation3 + $0x38] sm:$0x1f]
  %v517 = vld [vmem:[#allocation3 + $0x48] sm:$0x1f]
  %v518 = vld [vmem:[#allocation3 + $0x58] sm:$0x1f]
  %v519 = vld [vmem:[#allocation3 + $0x68] sm:$0x1f]
  %v520 = vld [vmem:[#allocation3 + $0x78] sm:$0x1f]
  %v521 = vld [vmem:[#allocation3 + $0x9] sm:$0x1f]
  %v522 = vld [vmem:[#allocation3 + $0x19] sm:$0x1f]
  %v523 = vld [vmem:[#allocation3 + $0x29] sm:$0x1f]
  %v524 = vld [vmem:[#allocation3 + $0x39] sm:$0x1f]
  %v525 = vld [vmem:[#allocation3 + $0x49] sm:$0x1f]
  %v526 = vld [vmem:[#allocation3 + $0x59] sm:$0x1f]
  %v527 = vld [vmem:[#allocation3 + $0x69] sm:$0x1f]
  %v528 = vld [vmem:[#allocation3 + $0x79] sm:$0x1f]
  %537 = vrot.lane.b32.xlu0 %v521, 120
  %v538 = vpop.permute.xlu0 %537
  %539 = vrot.lane.b32.xlu0 %v522, 120
  %v540 = vpop.permute.xlu0 %539
  %541 = vrot.lane.b32.xlu0 %v523, 120
  %v542 = vpop.permute.xlu0 %541
  %543 = vrot.lane.b32.xlu0 %v524, 120
  %v544 = vpop.permute.xlu0 %543
  %545 = vrot.lane.b32.xlu0 %v525, 120
  %v546 = vpop.permute.xlu0 %545
  %547 = vrot.lane.b32.xlu0 %v526, 120
  %v548 = vpop.permute.xlu0 %547
  %549 = vrot.lane.b32.xlu0 %v527, 120
  %v550 = vpop.permute.xlu0 %549
  %551 = vrot.lane.b32.xlu0 %v528, 120
  %v552 = vpop.permute.xlu0 %551
  %v561 = vadd.f32 %v513, %v538
  %v562 = vadd.f32 %v514, %v540
  %v563 = vadd.f32 %v515, %v542
  %v564 = vadd.f32 %v516, %v544
  %v565 = vadd.f32 %v517, %v546
  %v566 = vadd.f32 %v518, %v548
  %v567 = vadd.f32 %v519, %v550
  %v568 = vadd.f32 %v520, %v552
  %v569 = vld [vmem:[#allocation3 + $0x2] sm:$0xff]
  %v570 = vld [vmem:[#allocation3 + $0xa] sm:$0x1f]
  %v571 = vld [vmem:[#allocation3 + $0x12] sm:$0xff]
  %v572 = vld [vmem:[#allocation3 + $0x1a] sm:$0x1f]
  %v573 = vld [vmem:[#allocation3 + $0x22] sm:$0xff]
  %v574 = vld [vmem:[#allocation3 + $0x2a] sm:$0x1f]
  %v575 = vld [vmem:[#allocation3 + $0x32] sm:$0xff]
  %v576 = vld [vmem:[#allocation3 + $0x3a] sm:$0x1f]
  %v577 = vld [vmem:[#allocation3 + $0x42] sm:$0xff]
  %v578 = vld [vmem:[#allocation3 + $0x4a] sm:$0x1f]
  %v579 = vld [vmem:[#allocation3 + $0x52] sm:$0xff]
  %v580 = vld [vmem:[#allocation3 + $0x5a] sm:$0x1f]
  %v581 = vld [vmem:[#allocation3 + $0x62] sm:$0xff]
  %v582 = vld [vmem:[#allocation3 + $0x6a] sm:$0x1f]
  %v583 = vld [vmem:[#allocation3 + $0x72] sm:$0xff]
  %v584 = vld [vmem:[#allocation3 + $0x7a] sm:$0x1f]
  %601 = vrot.lane.b32.xlu0 %v569, 112
  %v602 = vpop.permute.xlu0 %601
  %603 = vrot.lane.b32.xlu0 %v570, 112
  %v604 = vpop.permute.xlu0 %603
  %605 = vrot.lane.b32.xlu0 %v571, 112
  %v606 = vpop.permute.xlu0 %605
  %607 = vrot.lane.b32.xlu0 %v572, 112
  %v608 = vpop.permute.xlu0 %607
  %609 = vrot.lane.b32.xlu0 %v573, 112
  %v610 = vpop.permute.xlu0 %609
  %611 = vrot.lane.b32.xlu0 %v574, 112
  %v612 = vpop.permute.xlu0 %611
  %613 = vrot.lane.b32.xlu0 %v575, 112
  %v614 = vpop.permute.xlu0 %613
  %615 = vrot.lane.b32.xlu0 %v576, 112
  %v616 = vpop.permute.xlu0 %615
  %617 = vrot.lane.b32.xlu0 %v577, 112
  %v618 = vpop.permute.xlu0 %617
  %619 = vrot.lane.b32.xlu0 %v578, 112
  %v620 = vpop.permute.xlu0 %619
  %621 = vrot.lane.b32.xlu0 %v579, 112
  %v622 = vpop.permute.xlu0 %621
  %623 = vrot.lane.b32.xlu0 %v580, 112
  %v624 = vpop.permute.xlu0 %623
  %625 = vrot.lane.b32.xlu0 %v581, 112
  %v626 = vpop.permute.xlu0 %625
  %627 = vrot.lane.b32.xlu0 %v582, 112
  %v628 = vpop.permute.xlu0 %627
  %629 = vrot.lane.b32.xlu0 %v583, 112
  %v630 = vpop.permute.xlu0 %629
  %631 = vrot.lane.b32.xlu0 %v584, 112
  %v632 = vpop.permute.xlu0 %631
  %v649 = vadd.f32 %v311, %v602
  %v650 = vadd.f32 %v561, %v604
  %v651 = vadd.f32 %v313, %v606
  %v652 = vadd.f32 %v562, %v608
  %v653 = vadd.f32 %v315, %v610
  %v654 = vadd.f32 %v563, %v612
  %v655 = vadd.f32 %v317, %v614
  %v656 = vadd.f32 %v564, %v616
  %v657 = vadd.f32 %v319, %v618
  %v658 = vadd.f32 %v565, %v620
  %v659 = vadd.f32 %v321, %v622
  %v660 = vadd.f32 %v566, %v624
  %v661 = vadd.f32 %v323, %v626
  %v662 = vadd.f32 %v567, %v628
  %v663 = vadd.f32 %v325, %v630
  %v664 = vadd.f32 %v568, %v632
  %v665 = vld [vmem:[#allocation3 + $0x3] sm:$0xff]
  %v666 = vld [vmem:[#allocation3 + $0xb] sm:$0x1f]
  %v667 = vld [vmem:[#allocation3 + $0x13] sm:$0xff]
  %v668 = vld [vmem:[#allocation3 + $0x1b] sm:$0x1f]
  %v669 = vld [vmem:[#allocation3 + $0x23] sm:$0xff]
  %v670 = vld [vmem:[#allocation3 + $0x2b] sm:$0x1f]
  %v671 = vld [vmem:[#allocation3 + $0x33] sm:$0xff]
  %v672 = vld [vmem:[#allocation3 + $0x3b] sm:$0x1f]
  %v673 = vld [vmem:[#allocation3 + $0x43] sm:$0xff]
  %v674 = vld [vmem:[#allocation3 + $0x4b] sm:$0x1f]
  %v675 = vld [vmem:[#allocation3 + $0x53] sm:$0xff]
  %v676 = vld [vmem:[#allocation3 + $0x5b] sm:$0x1f]
  %v677 = vld [vmem:[#allocation3 + $0x63] sm:$0xff]
  %v678 = vld [vmem:[#allocation3 + $0x6b] sm:$0x1f]
  %v679 = vld [vmem:[#allocation3 + $0x73] sm:$0xff]
  %v680 = vld [vmem:[#allocation3 + $0x7b] sm:$0x1f]
  %697 = vrot.lane.b32.xlu0 %v665, 104
  %v698 = vpop.permute.xlu0 %697
  %699 = vrot.lane.b32.xlu0 %v666, 104
  %v700 = vpop.permute.xlu0 %699
  %701 = vrot.lane.b32.xlu0 %v667, 104
  %v702 = vpop.permute.xlu0 %701
  %703 = vrot.lane.b32.xlu0 %v668, 104
  %v704 = vpop.permute.xlu0 %703
  %705 = vrot.lane.b32.xlu0 %v669, 104
  %v706 = vpop.permute.xlu0 %705
  %707 = vrot.lane.b32.xlu0 %v670, 104
  %v708 = vpop.permute.xlu0 %707
  %709 = vrot.lane.b32.xlu0 %v671, 104
  %v710 = vpop.permute.xlu0 %709
  %711 = vrot.lane.b32.xlu0 %v672, 104
  %v712 = vpop.permute.xlu0 %711
  %713 = vrot.lane.b32.xlu0 %v673, 104
  %v714 = vpop.permute.xlu0 %713
  %715 = vrot.lane.b32.xlu0 %v674, 104
  %v716 = vpop.permute.xlu0 %715
  %717 = vrot.lane.b32.xlu0 %v675, 104
  %v718 = vpop.permute.xlu0 %717
  %719 = vrot.lane.b32.xlu0 %v676, 104
  %v720 = vpop.permute.xlu0 %719
  %721 = vrot.lane.b32.xlu0 %v677, 104
  %v722 = vpop.permute.xlu0 %721
  %723 = vrot.lane.b32.xlu0 %v678, 104
  %v724 = vpop.permute.xlu0 %723
  %725 = vrot.lane.b32.xlu0 %v679, 104
  %v726 = vpop.permute.xlu0 %725
  %727 = vrot.lane.b32.xlu0 %v680, 104
  %v728 = vpop.permute.xlu0 %727
  %v745 = vadd.f32 %v649, %v698
  %v746 = vadd.f32 %v650, %v700
  %v747 = vadd.f32 %v651, %v702
  %v748 = vadd.f32 %v652, %v704
  %v749 = vadd.f32 %v653, %v706
  %v750 = vadd.f32 %v654, %v708
  %v751 = vadd.f32 %v655, %v710
  %v752 = vadd.f32 %v656, %v712
  %v753 = vadd.f32 %v657, %v714
  %v754 = vadd.f32 %v658, %v716
  %v755 = vadd.f32 %v659, %v718
  %v756 = vadd.f32 %v660, %v720
  %v757 = vadd.f32 %v661, %v722
  %v758 = vadd.f32 %v662, %v724
  %v759 = vadd.f32 %v663, %v726
  %v760 = vadd.f32 %v664, %v728
  %v761 = vmax.f32 %v745, 0.0
  %v762 = vmax.f32 %v746, 0.0
  %v763 = vmax.f32 %v747, 0.0
  %v764 = vmax.f32 %v748, 0.0
  %v765 = vmax.f32 %v749, 0.0
  %v766 = vmax.f32 %v750, 0.0
  %v767 = vmax.f32 %v751, 0.0
  %v768 = vmax.f32 %v752, 0.0
  %v769 = vmax.f32 %v753, 0.0
  %v770 = vmax.f32 %v754, 0.0
  %v771 = vmax.f32 %v755, 0.0
  %v772 = vmax.f32 %v756, 0.0
  %v773 = vmax.f32 %v757, 0.0
  %v774 = vmax.f32 %v758, 0.0
  %v775 = vmax.f32 %v759, 0.0
  %v776 = vmax.f32 %v760, 0.0
  %vm777 = vcmask 261312
  %v778 = vsel %vm777, %v761, -inf
  %vm779 = vcmask 258240
  %v780 = vsel %vm779, %v762, -inf
  %v781 = vmax.f32 %v778, %v780
  %v782 = vrot.slane %v781, 4
  %v783 = vmax.f32 %v781, %v782
  %v784 = vrot.slane %v783, 2
  %v785 = vmax.f32 %v783, %v784
  %v786 = vrot.slane %v785, 1
  %v787 = vmax.f32 %v785, %v786
  %v788 = vsel %vm777, %v763, -inf
  %v789 = vsel %vm779, %v764, -inf
  %v790 = vmax.f32 %v788, %v789
  %v791 = vrot.slane %v790, 4
  %v792 = vmax.f32 %v790, %v791
  %v793 = vrot.slane %v792, 2
  %v794 = vmax.f32 %v792, %v793
  %v795 = vrot.slane %v794, 1
  %v796 = vmax.f32 %v794, %v795
  %v797 = vsel %vm777, %v765, -inf
  %v798 = vsel %vm779, %v766, -inf
  %v799 = vmax.f32 %v797, %v798
  %v800 = vrot.slane %v799, 4
  %v801 = vmax.f32 %v799, %v800
  %v802 = vrot.slane %v801, 2
  %v803 = vmax.f32 %v801, %v802
  %v804 = vrot.slane %v803, 1
  %v805 = vmax.f32 %v803, %v804
  %v806 = vsel %vm777, %v767, -inf
  %v807 = vsel %vm779, %v768, -inf
  %v808 = vmax.f32 %v806, %v807
  %v809 = vrot.slane %v808, 4
  %v810 = vmax.f32 %v808, %v809
  %v811 = vrot.slane %v810, 2
  %v812 = vmax.f32 %v810, %v811
  %v813 = vrot.slane %v812, 1
  %v814 = vmax.f32 %v812, %v813
  %v815 = vsel %vm777, %v769, -inf
  %v816 = vsel %vm779, %v770, -inf
  %v817 = vmax.f32 %v815, %v816
  %v818 = vrot.slane %v817, 4
  %v819 = vmax.f32 %v817, %v818
  %v820 = vrot.slane %v819, 2
  %v821 = vmax.f32 %v819, %v820
  %v822 = vrot.slane %v821, 1
  %v823 = vmax.f32 %v821, %v822
  %v824 = vsel %vm777, %v771, -inf
  %v825 = vsel %vm779, %v772, -inf
  %v826 = vmax.f32 %v824, %v825
  %v827 = vrot.slane %v826, 4
  %v828 = vmax.f32 %v826, %v827
  %v829 = vrot.slane %v828, 2
  %v830 = vmax.f32 %v828, %v829
  %v831 = vrot.slane %v830, 1
  %v832 = vmax.f32 %v830, %v831
  %v833 = vsel %vm777, %v773, -inf
  %v834 = vsel %vm779, %v774, -inf
  %v835 = vmax.f32 %v833, %v834
  %v836 = vrot.slane %v835, 4
  %v837 = vmax.f32 %v835, %v836
  %v838 = vrot.slane %v837, 2
  %v839 = vmax.f32 %v837, %v838
  %v840 = vrot.slane %v839, 1
  %v841 = vmax.f32 %v839, %v840
  %v842 = vsel %vm777, %v775, -inf
  %v843 = vsel %vm779, %v776, -inf
  %v844 = vmax.f32 %v842, %v843
  %v845 = vrot.slane %v844, 4
  %v846 = vmax.f32 %v844, %v845
  %v847 = vrot.slane %v846, 2
  %v848 = vmax.f32 %v846, %v847
  %v849 = vrot.slane %v848, 1
  %v850 = vmax.f32 %v848, %v849
  %v851 = vld [vmem:[#allocation3 + $0x8] sm:$0xf]
  %v852 = vld [vmem:[#allocation3 + $0x18] sm:$0xf]
  %v853 = vld [vmem:[#allocation3 + $0x28] sm:$0xf]
  %v854 = vld [vmem:[#allocation3 + $0x38] sm:$0xf]
  %v855 = vld [vmem:[#allocation3 + $0x48] sm:$0xf]
  %v856 = vld [vmem:[#allocation3 + $0x58] sm:$0xf]
  %v857 = vld [vmem:[#allocation3 + $0x68] sm:$0xf]
  %v858 = vld [vmem:[#allocation3 + $0x78] sm:$0xf]
  %v859 = vld [vmem:[#allocation3 + $0x9] sm:$0xf]
  %v860 = vld [vmem:[#allocation3 + $0x19] sm:$0xf]
  %v861 = vld [vmem:[#allocation3 + $0x29] sm:$0xf]
  %v862 = vld [vmem:[#allocation3 + $0x39] sm:$0xf]
  %v863 = vld [vmem:[#allocation3 + $0x49] sm:$0xf]
  %v864 = vld [vmem:[#allocation3 + $0x59] sm:$0xf]
  %v865 = vld [vmem:[#allocation3 + $0x69] sm:$0xf]
  %v866 = vld [vmem:[#allocation3 + $0x79] sm:$0xf]
  %875 = vrot.lane.b32.xlu0 %v859, 120
  %v876 = vpop.permute.xlu0 %875
  %877 = vrot.lane.b32.xlu0 %v860, 120
  %v878 = vpop.permute.xlu0 %877
  %879 = vrot.lane.b32.xlu0 %v861, 120
  %v880 = vpop.permute.xlu0 %879
  %881 = vrot.lane.b32.xlu0 %v862, 120
  %v882 = vpop.permute.xlu0 %881
  %883 = vrot.lane.b32.xlu0 %v863, 120
  %v884 = vpop.permute.xlu0 %883
  %885 = vrot.lane.b32.xlu0 %v864, 120
  %v886 = vpop.permute.xlu0 %885
  %887 = vrot.lane.b32.xlu0 %v865, 120
  %v888 = vpop.permute.xlu0 %887
  %889 = vrot.lane.b32.xlu0 %v866, 120
  %v890 = vpop.permute.xlu0 %889
  %v899 = vadd.f32 %v851, %v876
  %v900 = vadd.f32 %v852, %v878
  %v901 = vadd.f32 %v853, %v880
  %v902 = vadd.f32 %v854, %v882
  %v903 = vadd.f32 %v855, %v884
  %v904 = vadd.f32 %v856, %v886
  %v905 = vadd.f32 %v857, %v888
  %v906 = vadd.f32 %v858, %v890
  %v907 = vld [vmem:[#allocation3 + $0xa] sm:$0xf]
  %v908 = vld [vmem:[#allocation3 + $0x1a] sm:$0xf]
  %v909 = vld [vmem:[#allocation3 + $0x2a] sm:$0xf]
  %v910 = vld [vmem:[#allocation3 + $0x3a] sm:$0xf]
  %v911 = vld [vmem:[#allocation3 + $0x4a] sm:$0xf]
  %v912 = vld [vmem:[#allocation3 + $0x5a] sm:$0xf]
  %v913 = vld [vmem:[#allocation3 + $0x6a] sm:$0xf]
  %v914 = vld [vmem:[#allocation3 + $0x7a] sm:$0xf]
  %923 = vrot.lane.b32.xlu0 %v907, 112
  %v924 = vpop.permute.xlu0 %923
  %925 = vrot.lane.b32.xlu0 %v908, 112
  %v926 = vpop.permute.xlu0 %925
  %927 = vrot.lane.b32.xlu0 %v909, 112
  %v928 = vpop.permute.xlu0 %927
  %929 = vrot.lane.b32.xlu0 %v910, 112
  %v930 = vpop.permute.xlu0 %929
  %931 = vrot.lane.b32.xlu0 %v911, 112
  %v932 = vpop.permute.xlu0 %931
  %933 = vrot.lane.b32.xlu0 %v912, 112
  %v934 = vpop.permute.xlu0 %933
  %935 = vrot.lane.b32.xlu0 %v913, 112
  %v936 = vpop.permute.xlu0 %935
  %937 = vrot.lane.b32.xlu0 %v914, 112
  %v938 = vpop.permute.xlu0 %937
  %v947 = vadd.f32 %v899, %v924
  %v948 = vadd.f32 %v900, %v926
  %v949 = vadd.f32 %v901, %v928
  %v950 = vadd.f32 %v902, %v930
  %v951 = vadd.f32 %v903, %v932
  %v952 = vadd.f32 %v904, %v934
  %v953 = vadd.f32 %v905, %v936
  %v954 = vadd.f32 %v906, %v938
  %v955 = vld [vmem:[#allocation3 + $0x3] sm:$0xff]
  %v956 = vld [vmem:[#allocation3 + $0xb] sm:$0xf]
  %v957 = vld [vmem:[#allocation3 + $0x13] sm:$0xff]
  %v958 = vld [vmem:[#allocation3 + $0x1b] sm:$0xf]
  %v959 = vld [vmem:[#allocation3 + $0x23] sm:$0xff]
  %v960 = vld [vmem:[#allocation3 + $0x2b] sm:$0xf]
  %v961 = vld [vmem:[#allocation3 + $0x33] sm:$0xff]
  %v962 = vld [vmem:[#allocation3 + $0x3b] sm:$0xf]
  %v963 = vld [vmem:[#allocation3 + $0x43] sm:$0xff]
  %v964 = vld [vmem:[#allocation3 + $0x4b] sm:$0xf]
  %v965 = vld [vmem:[#allocation3 + $0x53] sm:$0xff]
  %v966 = vld [vmem:[#allocation3 + $0x5b] sm:$0xf]
  %v967 = vld [vmem:[#allocation3 + $0x63] sm:$0xff]
  %v968 = vld [vmem:[#allocation3 + $0x6b] sm:$0xf]
  %v969 = vld [vmem:[#allocation3 + $0x73] sm:$0xff]
  %v970 = vld [vmem:[#allocation3 + $0x7b] sm:$0xf]
  %987 = vrot.lane.b32.xlu0 %v955, 104
  %v988 = vpop.permute.xlu0 %987
  %989 = vrot.lane.b32.xlu0 %v956, 104
  %v990 = vpop.permute.xlu0 %989
  %991 = vrot.lane.b32.xlu0 %v957, 104
  %v992 = vpop.permute.xlu0 %991
  %993 = vrot.lane.b32.xlu0 %v958, 104
  %v994 = vpop.permute.xlu0 %993
  %995 = vrot.lane.b32.xlu0 %v959, 104
  %v996 = vpop.permute.xlu0 %995
  %997 = vrot.lane.b32.xlu0 %v960, 104
  %v998 = vpop.permute.xlu0 %997
  %999 = vrot.lane.b32.xlu0 %v961, 104
  %v1000 = vpop.permute.xlu0 %999
  %1001 = vrot.lane.b32.xlu0 %v962, 104
  %v1002 = vpop.permute.xlu0 %1001
  %1003 = vrot.lane.b32.xlu0 %v963, 104
  %v1004 = vpop.permute.xlu0 %1003
  %1005 = vrot.lane.b32.xlu0 %v964, 104
  %v1006 = vpop.permute.xlu0 %1005
  %1007 = vrot.lane.b32.xlu0 %v965, 104
  %v1008 = vpop.permute.xlu0 %1007
  %1009 = vrot.lane.b32.xlu0 %v966, 104
  %v1010 = vpop.permute.xlu0 %1009
  %1011 = vrot.lane.b32.xlu0 %v967, 104
  %v1012 = vpop.permute.xlu0 %1011
  %1013 = vrot.lane.b32.xlu0 %v968, 104
  %v1014 = vpop.permute.xlu0 %1013
  %1015 = vrot.lane.b32.xlu0 %v969, 104
  %v1016 = vpop.permute.xlu0 %1015
  %1017 = vrot.lane.b32.xlu0 %v970, 104
  %v1018 = vpop.permute.xlu0 %1017
  %v1035 = vadd.f32 %v649, %v988
  %v1036 = vadd.f32 %v947, %v990
  %v1037 = vadd.f32 %v651, %v992
  %v1038 = vadd.f32 %v948, %v994
  %v1039 = vadd.f32 %v653, %v996
  %v1040 = vadd.f32 %v949, %v998
  %v1041 = vadd.f32 %v655, %v1000
  %v1042 = vadd.f32 %v950, %v1002
  %v1043 = vadd.f32 %v657, %v1004
  %v1044 = vadd.f32 %v951, %v1006
  %v1045 = vadd.f32 %v659, %v1008
  %v1046 = vadd.f32 %v952, %v1010
  %v1047 = vadd.f32 %v661, %v1012
  %v1048 = vadd.f32 %v953, %v1014
  %v1049 = vadd.f32 %v663, %v1016
  %v1050 = vadd.f32 %v954, %v1018
  %v1051 = vld [vmem:[#allocation3 + $0x4] sm:$0xff]
  %v1052 = vld [vmem:[#allocation3 + $0xc] sm:$0xf]
  %v1053 = vld [vmem:[#allocation3 + $0x14] sm:$0xff]
  %v1054 = vld [vmem:[#allocation3 + $0x1c] sm:$0xf]
  %v1055 = vld [vmem:[#allocation3 + $0x24] sm:$0xff]
  %v1056 = vld [vmem:[#allocation3 + $0x2c] sm:$0xf]
  %v1057 = vld [vmem:[#allocation3 + $0x34] sm:$0xff]
  %v1058 = vld [vmem:[#allocation3 + $0x3c] sm:$0xf]
  %v1059 = vld [vmem:[#allocation3 + $0x44] sm:$0xff]
  %v1060 = vld [vmem:[#allocation3 + $0x4c] sm:$0xf]
  %v1061 = vld [vmem:[#allocation3 + $0x54] sm:$0xff]
  %v1062 = vld [vmem:[#allocation3 + $0x5c] sm:$0xf]
  %v1063 = vld [vmem:[#allocation3 + $0x64] sm:$0xff]
  %v1064 = vld [vmem:[#allocation3 + $0x6c] sm:$0xf]
  %v1065 = vld [vmem:[#allocation3 + $0x74] sm:$0xff]
  %v1066 = vld [vmem:[#allocation3 + $0x7c] sm:$0xf]
  %1083 = vrot.lane.b32.xlu0 %v1051, 96
  %v1084 = vpop.permute.xlu0 %1083
  %1085 = vrot.lane.b32.xlu0 %v1052, 96
  %v1086 = vpop.permute.xlu0 %1085
  %1087 = vrot.lane.b32.xlu0 %v1053, 96
  %v1088 = vpop.permute.xlu0 %1087
  %1089 = vrot.lane.b32.xlu0 %v1054, 96
  %v1090 = vpop.permute.xlu0 %1089
  %1091 = vrot.lane.b32.xlu0 %v1055, 96
  %v1092 = vpop.permute.xlu0 %1091
  %1093 = vrot.lane.b32.xlu0 %v1056, 96
  %v1094 = vpop.permute.xlu0 %1093
  %1095 = vrot.lane.b32.xlu0 %v1057, 96
  %v1096 = vpop.permute.xlu0 %1095
  %1097 = vrot.lane.b32.xlu0 %v1058, 96
  %v1098 = vpop.permute.xlu0 %1097
  %1099 = vrot.lane.b32.xlu0 %v1059, 96
  %v1100 = vpop.permute.xlu0 %1099
  %1101 = vrot.lane.b32.xlu0 %v1060, 96
  %v1102 = vpop.permute.xlu0 %1101
  %1103 = vrot.lane.b32.xlu0 %v1061, 96
  %v1104 = vpop.permute.xlu0 %1103
  %1105 = vrot.lane.b32.xlu0 %v1062, 96
  %v1106 = vpop.permute.xlu0 %1105
  %1107 = vrot.lane.b32.xlu0 %v1063, 96
  %v1108 = vpop.permute.xlu0 %1107
  %1109 = vrot.lane.b32.xlu0 %v1064, 96
  %v1110 = vpop.permute.xlu0 %1109
  %1111 = vrot.lane.b32.xlu0 %v1065, 96
  %v1112 = vpop.permute.xlu0 %1111
  %1113 = vrot.lane.b32.xlu0 %v1066, 96
  %v1114 = vpop.permute.xlu0 %1113
  %v1131 = vadd.f32 %v1035, %v1084
  %v1132 = vadd.f32 %v1036, %v1086
  %v1133 = vadd.f32 %v1037, %v1088
  %v1134 = vadd.f32 %v1038, %v1090
  %v1135 = vadd.f32 %v1039, %v1092
  %v1136 = vadd.f32 %v1040, %v1094
  %v1137 = vadd.f32 %v1041, %v1096
  %v1138 = vadd.f32 %v1042, %v1098
  %v1139 = vadd.f32 %v1043, %v1100
  %v1140 = vadd.f32 %v1044, %v1102
  %v1141 = vadd.f32 %v1045, %v1104
  %v1142 = vadd.f32 %v1046, %v1106
  %v1143 = vadd.f32 %v1047, %v1108
  %v1144 = vadd.f32 %v1048, %v1110
  %v1145 = vadd.f32 %v1049, %v1112
  %v1146 = vadd.f32 %v1050, %v1114
  %v1147 = vmax.f32 %v1131, 0.0
  %v1148 = vmax.f32 %v1132, 0.0
  %v1149 = vmax.f32 %v1133, 0.0
  %v1150 = vmax.f32 %v1134, 0.0
  %v1151 = vmax.f32 %v1135, 0.0
  %v1152 = vmax.f32 %v1136, 0.0
  %v1153 = vmax.f32 %v1137, 0.0
  %v1154 = vmax.f32 %v1138, 0.0
  %v1155 = vmax.f32 %v1139, 0.0
  %v1156 = vmax.f32 %v1140, 0.0
  %v1157 = vmax.f32 %v1141, 0.0
  %v1158 = vmax.f32 %v1142, 0.0
  %v1159 = vmax.f32 %v1143, 0.0
  %v1160 = vmax.f32 %v1144, 0.0
  %v1161 = vmax.f32 %v1145, 0.0
  %v1162 = vmax.f32 %v1146, 0.0
  %vm1163 = vcmask 523712
  %v1164 = vsel %vm1163, %v1147, -inf
  %vm1165 = vcmask 519616
  %v1166 = vsel %vm1165, %v1148, -inf
  %v1167 = vmax.f32 %v1164, %v1166
  %v1168 = vrot.slane %v1167, 4
  %v1169 = vmax.f32 %v1167, %v1168
  %v1170 = vrot.slane %v1169, 2
  %v1171 = vmax.f32 %v1169, %v1170
  %v1172 = vrot.slane %v1171, 1
  %v1173 = vmax.f32 %v1171, %v1172
  %v1174 = vsel %vm1163, %v1149, -inf
  %v1175 = vsel %vm1165, %v1150, -inf
  %v1176 = vmax.f32 %v1174, %v1175
  %v1177 = vrot.slane %v1176, 4
  %v1178 = vmax.f32 %v1176, %v1177
  %v1179 = vrot.slane %v1178, 2
  %v1180 = vmax.f32 %v1178, %v1179
  %v1181 = vrot.slane %v1180, 1
  %v1182 = vmax.f32 %v1180, %v1181
  %v1183 = vsel %vm1163, %v1151, -inf
  %v1184 = vsel %vm1165, %v1152, -inf
  %v1185 = vmax.f32 %v1183, %v1184
  %v1186 = vrot.slane %v1185, 4
  %v1187 = vmax.f32 %v1185, %v1186
  %v1188 = vrot.slane %v1187, 2
  %v1189 = vmax.f32 %v1187, %v1188
  %v1190 = vrot.slane %v1189, 1
  %v1191 = vmax.f32 %v1189, %v1190
  %v1192 = vsel %vm1163, %v1153, -inf
  %v1193 = vsel %vm1165, %v1154, -inf
  %v1194 = vmax.f32 %v1192, %v1193
  %v1195 = vrot.slane %v1194, 4
  %v1196 = vmax.f32 %v1194, %v1195
  %v1197 = vrot.slane %v1196, 2
  %v1198 = vmax.f32 %v1196, %v1197
  %v1199 = vrot.slane %v1198, 1
  %v1200 = vmax.f32 %v1198, %v1199
  %v1201 = vsel %vm1163, %v1155, -inf
  %v1202 = vsel %vm1165, %v1156, -inf
  %v1203 = vmax.f32 %v1201, %v1202
  %v1204 = vrot.slane %v1203, 4
  %v1205 = vmax.f32 %v1203, %v1204
  %v1206 = vrot.slane %v1205, 2
  %v1207 = vmax.f32 %v1205, %v1206
  %v1208 = vrot.slane %v1207, 1
  %v1209 = vmax.f32 %v1207, %v1208
  %v1210 = vsel %vm1163, %v1157, -inf
  %v1211 = vsel %vm1165, %v1158, -inf
  %v1212 = vmax.f32 %v1210, %v1211
  %v1213 = vrot.slane %v1212, 4
  %v1214 = vmax.f32 %v1212, %v1213
  %v1215 = vrot.slane %v1214, 2
  %v1216 = vmax.f32 %v1214, %v1215
  %v1217 = vrot.slane %v1216, 1
  %v1218 = vmax.f32 %v1216, %v1217
  %v1219 = vsel %vm1163, %v1159, -inf
  %v1220 = vsel %vm1165, %v1160, -inf
  %v1221 = vmax.f32 %v1219, %v1220
  %v1222 = vrot.slane %v1221, 4
  %v1223 = vmax.f32 %v1221, %v1222
  %v1224 = vrot.slane %v1223, 2
  %v1225 = vmax.f32 %v1223, %v1224
  %v1226 = vrot.slane %v1225, 1
  %v1227 = vmax.f32 %v1225, %v1226
  %v1228 = vsel %vm1163, %v1161, -inf
  %v1229 = vsel %vm1165, %v1162, -inf
  %v1230 = vmax.f32 %v1228, %v1229
  %v1231 = vrot.slane %v1230, 4
  %v1232 = vmax.f32 %v1230, %v1231
  %v1233 = vrot.slane %v1232, 2
  %v1234 = vmax.f32 %v1232, %v1233
  %v1235 = vrot.slane %v1234, 1
  %v1236 = vmax.f32 %v1234, %v1235
  %vm1245 = vcmask 1041409
  %v1246 = vsel %vm1245, %v458, %v449
  %vm1247 = vcmask 1042434
  %v1248 = vsel %vm1247, %v467, %v1246
  %vm1249 = vcmask 1043459
  %v1250 = vsel %vm1249, %v476, %v1248
  %vm1251 = vcmask 1044484
  %v1252 = vsel %vm1251, %v485, %v1250
  %vm1253 = vcmask 1045509
  %v1254 = vsel %vm1253, %v494, %v1252
  %vm1255 = vcmask 1046534
  %v1256 = vsel %vm1255, %v503, %v1254
  %vm1257 = vcmask 1047559
  %v1258 = vsel %vm1257, %v512, %v1256
  %v1268 = vsel %vm1245, %v796, %v787
  %v1269 = vsel %vm1247, %v805, %v1268
  %v1270 = vsel %vm1249, %v814, %v1269
  %v1271 = vsel %vm1251, %v823, %v1270
  %v1272 = vsel %vm1253, %v832, %v1271
  %v1273 = vsel %vm1255, %v841, %v1272
  %v1274 = vsel %vm1257, %v850, %v1273
  %1275 = vrot.lane.b32.xlu0 %v1274, 112
  %v1276 = vpop.permute.xlu0 %1275
  %v1286 = vsel %vm1245, %v1182, %v1173
  %v1287 = vsel %vm1247, %v1191, %v1286
  %v1288 = vsel %vm1249, %v1200, %v1287
  %v1289 = vsel %vm1251, %v1209, %v1288
  %v1290 = vsel %vm1253, %v1218, %v1289
  %v1291 = vsel %vm1255, %v1227, %v1290
  %v1292 = vsel %vm1257, %v1236, %v1291
  %1293 = vrot.lane.b32.xlu0 %v1292, 88
  %v1294 = vpop.permute.xlu0 %1293
  %v1296 = vsel %vm439, %v1258, %v1276
  %vm1297 = vcmask 130048
  %v1298 = vsel %vm1297, %v1296, %v1294
  %v1299 = vpack.c.bf16 %v1298, %v1298
  %v1300 = vld [vmem:[%s4] sm:$0xf]
  %v1301 = vld [vmem:[%s4 + $0x4] sm:$0xf]
  %v1302 = vld [vmem:[%s4 + $0x8] sm:$0xf]
  %v1303 = vld [vmem:[%s5] sm:$0x1]
  %v1305 = vperm.slane %v1303, 0
  %v1310 = vunpack.c.l.b16 %v1300
  %v1311 = vunpack.c.l.b16 %v1301
  %v1312 = vunpack.c.l.b16 %v1302
  %v1313 = vpack.c.b16 %v1311, %v1310
  %v1314 = vpack.c.b16 %v1312, %v1312
  %vm1316 = vcmask 195584
  %v1318 = vsel %vm1316, %v1299, 0
  %vm1320 = vcmask 1043456
  %v1322 = vsel %vm1320, %v1314, 0
  %1324 = vmatpush.bf16.msra.mxu0 0
  %1325 = vmatpush.bf16.msra.mxu0 0
  %1326 = vmatpush.bf16.msra.mxu0 0
  %1327 = vmatpush.bf16.msra.mxu0 0
  %1328 = vmatpush.bf16.msra.mxu0 0
  %1329 = vmatpush.bf16.msra.mxu0 0
  %1330 = vmatpush.bf16.msra.mxu0 %v1322
  %1331 = vmatpush.bf16.msra.mxu0 %v1313
  %1332 = vmatmul.bf16.gmra.mxu0 %v1318
  %v1333 = vpop.f32.mrf.mxu0
  %v1334 = vadd.f32 %v1305, %v1333
  %v1335 = vpop.f32.mrf.mxu0
  %1336 = vdwg.mxu0
  %1337 = vst [vmem:[%s6] sm:$0xff] %v1334
  // Predicated region
  $region62: #{textcnn_forward.1} parent=0 // pred_check
    _
  $region63: #{textcnn_forward.1} parent=0 // pred_check_branch
    %1339 = sbr.rel (0) target = $region65
  $region64: #{textcnn_forward.1} parent=0 // pred_region
    _
  $region65: #{textcnn_forward.1} parent=0 // pred_fallthru
    _
  // Predicated region
  $region66: #{textcnn_forward.1} parent=0 // pred_check
    _
  $region67: #{textcnn_forward.1} parent=0 // pred_check_branch
    %1341 = sbr.rel (0) target = $region69
  $region68: #{textcnn_forward.1} parent=0 // pred_region
    _
  $region69: #{textcnn_forward.1} parent=0 // pred_fallthru
    _
  %1342 = vsyncmov [#allocation4]
  %s1343 = vpop.sfrf %1342
  %p1344 = scmp.eq.s32.totalorder %s1343, 0
  %p1345 = pneg %p1344
  %1347 = shalt.err (%p1345)

</llo_original>
